<compile_context>
chip_gen: v5e
topology: v5e:2x2
jax: 0.10.0
libtpu: 0.0.40
codegen_flags: <defaults>
</compile_context>

<pallas_src>
import jax
import jax.numpy as jnp
from jax import lax
from jax.experimental import pallas as pl
from jax.experimental.pallas import tpu as pltpu


def _round_up(a, b):
    return ((a + b - 1) // b) * b


def _round_down_mult(a, b):
    return max(b, (a // b) * b)


def _vmem_capacity_bytes():
    try:
        return int(pltpu.get_tpu_info().vmem_capacity_bytes)
    except Exception:
        return 64 * 1024 * 1024   # conservative fallback: v7x per-TC physical VMEM


# ----------------------------- kernel bodies ------------------------------

def _gaussian_kernel_2d(scale_ref, xr_ref, xct_ref, rn_ref, cn_ref, k_ref):
    # scale_ref: (1,)  f32 SMEM scalar  -1/(2*sigma^2)
    # xr_ref:    (tm, F)  row tile of X          (gram dtype)
    # xct_ref:   (F, tn)  column tile of X^T     (gram dtype)
    # rn_ref:    (tm, 1)  f32 squared norms of row tile
    # cn_ref:    (1, tn)  f32 squared norms of col tile
    # k_ref:     (tm, tn) output tile
    gram = lax.dot_general(
        xr_ref[...], xct_ref[...],
        dimension_numbers=(((1,), (0,)), ((), ())),     # (tm,F)@(F,tn), no transpose
        preferred_element_type=jnp.float32)             # MXU, f32 accumulation
    l2 = jnp.maximum(rn_ref[...] + cn_ref[...] - 2.0 * gram, 0.0)
    k_ref[...] = jnp.exp(l2 * scale_ref[0]).astype(k_ref.dtype)


def _gaussian_kernel_3d(scale_ref, xr_ref, xct_ref, rn_ref, cn_ref, k_ref, acc_ref):
    # Feature dim chunked on grid axis 2; Gram accumulated in f32 VMEM scratch.
    kc = pl.program_id(2)

    @pl.when(kc == 0)
    def _init():
        acc_ref[...] = jnp.zeros_like(acc_ref)

    acc_ref[...] += lax.dot_general(
        xr_ref[...], xct_ref[...],
        dimension_numbers=(((1,), (0,)), ((), ())),
        preferred_element_type=jnp.float32)

    @pl.when(kc == pl.num_programs(2) - 1)
    def _finalize():
        l2 = jnp.maximum(rn_ref[...] + cn_ref[...] - 2.0 * acc_ref[...], 0.0)
        k_ref[...] = jnp.exp(l2 * scale_ref[0]).astype(k_ref.dtype)


# ------------------------------- wrapper ----------------------------------

def gaussian_kernel(x, *, sigma=None, track_running_stats=True, alpha=1.0,
                    tm_target=512, tn_target=512, tk_target=512,
                    gram_dtype=None, out_dtype=jnp.float32,
                    force_f_chunk=False):
    """Pallas equivalent of GaussianKernel.forward.

    Args:
      x: (M, F) input features (f32 or bf16).
      sigma / track_running_stats / alpha: same semantics as the PyTorch module.
      gram_dtype: optional dtype for the Gram operands (e.g. jnp.bfloat16).
      out_dtype: dtype of K (default f32, matching the reference).
      force_f_chunk: force the F-chunked accumulator path (testing / large F).

    Returns:
      (K, sigma_square): K is (M, M); sigma_square is the f32 scalar the module
      would store in self.sigma_square.
    """
    assert track_running_stats or sigma is not None
    m, f = x.shape

    # ---- sigma^2 pre-pass (analytic, O(M*F), plain JAX) --------------------
    xf = x.astype(jnp.float32)
    norms = jnp.sum(xf * xf, axis=1)                          # (M,)
    if track_running_stats:
        col_sum = jnp.sum(xf, axis=0)                         # (F,)
        mean_l2 = (2.0 * jnp.sum(norms) / m
                   - 2.0 * jnp.dot(col_sum, col_sum) / (m * m))
        sigma_square = jnp.float32(alpha) * mean_l2
    else:
        sigma_square = jnp.float32(float(sigma) ** 2)
    # TODO(synk): sigma^2 == 0 (all rows identical) -> Inf/NaN, same as the reference.
    scale = (-0.5 / sigma_square).reshape(1).astype(jnp.float32)   # -1/(2*sigma^2)

    # ---- tile selection under a per-generation VMEM budget -----------------
    gdtype = jnp.dtype(gram_dtype) if gram_dtype is not None else jnp.dtype(x.dtype)
    gbytes = gdtype.itemsize
    obytes = jnp.dtype(out_dtype).itemsize
    budget = int(_vmem_capacity_bytes() * 0.8)

    tn = min(tn_target, _round_up(m, 128))      # lane-dense output stores
    tm = min(tm_target, _round_up(m, 8))        # sublane-aligned rows

    def fp_2d(tm_, tn_):
        # double-buffered operands + double-buffered output tile + norms
        return (2 * tm_ * f * gbytes + 2 * f * tn_ * gbytes
                + 2 * tm_ * tn_ * obytes + 2 * (tm_ + tn_ + 2) * 4)

    def fp_3d(tm_, tn_, tk_):
        return (2 * tm_ * tk_ * gbytes + 2 * tk_ * tn_ * gbytes
                + 2 * tm_ * tn_ * obytes + tm_ * tn_ * 4      # + acc scratch
                + 2 * (tm_ + tn_ + 2) * 4)

    use_chunked = force_f_chunk or fp_2d(tm, tn) > budget
    if use_chunked:
        tk = min(tk_target, _round_up(f, 128))
        while fp_3d(tm, tn, tk) > budget and tk > 128:
            tk = _round_down_mult(tk // 2, 128)
        while fp_3d(tm, tn, tk) > budget and tn > 128:
            tn = _round_down_mult(tn // 2, 128)
        while fp_3d(tm, tn, tk) > budget and tm > 8:
            tm = _round_down_mult(tm // 2, 8)
        f_pad = _round_up(f, tk)
        footprint = fp_3d(tm, tn, tk)
    else:
        tk = None
        f_pad = f
        footprint = fp_2d(tm, tn)
    # Raise the scoped-VMEM limit (v5e default is only 16 MiB) but stay under
    # the physical cap; keep a floor so compiler-internal scratch still fits.
    vmem_limit = int(min(budget, max(footprint + footprint // 2, 32 * 1024 * 1024)))

    m_rows = _round_up(m, tm)
    m_cols = _round_up(m, tn)

    # ---- pad inputs; column operand pre-transposed to (F, M) ---------------
    xg = x.astype(gdtype)
    x_row = jnp.zeros((m_rows, f_pad), dtype=gdtype).at[:m, :f].set(xg)
    x_col_t = jnp.zeros((f_pad, m_cols), dtype=gdtype).at[:f, :m].set(xg.T)
    rn_pad = jnp.zeros((m_rows, 1), dtype=jnp.float32).at[:m, 0].set(norms)
    cn_pad = jnp.zeros((1, m_cols), dtype=jnp.float32).at[0, :m].set(norms)

    smem_spec = pl.BlockSpec(memory_space=pltpu.MemorySpace.SMEM)

    if use_chunked:
        grid = (m_rows // tm, m_cols // tn, f_pad // tk)   # reduction axis last
        k_pad = pl.pallas_call(
            _gaussian_kernel_3d,
            out_shape=jax.ShapeDtypeStruct((m_rows, m_cols), out_dtype),
            grid=grid,
            in_specs=[
                smem_spec,                                            # scale scalar
                pl.BlockSpec((tm, tk), lambda i, j, k: (i, k)),       # row tile
                pl.BlockSpec((tk, tn), lambda i, j, k: (k, j)),       # col tile (X^T)
                pl.BlockSpec((tm, 1), lambda i, j, k: (i, 0)),        # row norms
                pl.BlockSpec((1, tn), lambda i, j, k: (0, j)),        # col norms
            ],
            out_specs=pl.BlockSpec((tm, tn), lambda i, j, k: (i, j)),
            scratch_shapes=[pltpu.VMEM((tm, tn), jnp.float32)],
            compiler_params=pltpu.CompilerParams(
                dimension_semantics=("parallel", "parallel", "arbitrary"),
                vmem_limit_bytes=vmem_limit),
        )(scale, x_row, x_col_t, rn_pad, cn_pad)
    else:
        grid = (m_rows // tm, m_cols // tn)   # j innermost -> row tile stays resident
        k_pad = pl.pallas_call(
            _gaussian_kernel_2d,
            out_shape=jax.ShapeDtypeStruct((m_rows, m_cols), out_dtype),
            grid=grid,
            in_specs=[
                smem_spec,                                            # scale scalar
                pl.BlockSpec((tm, f_pad), lambda i, j: (i, 0)),       # row tile (const in j)
                pl.BlockSpec((f_pad, tn), lambda i, j: (0, j)),       # col tile (X^T)
                pl.BlockSpec((tm, 1), lambda i, j: (i, 0)),           # row norms
                pl.BlockSpec((1, tn), lambda i, j: (0, j)),           # col norms
            ],
            out_specs=pl.BlockSpec((tm, tn), lambda i, j: (i, j)),
            compiler_params=pltpu.CompilerParams(
                dimension_semantics=("parallel", "parallel"),
                vmem_limit_bytes=vmem_limit),
        )(scale, x_row, x_col_t, rn_pad, cn_pad)

    # TODO(synk): v7x-only symmetry exploitation (upper-triangle tiles + mirrored
    # store) and pl.Buffered(1) on the row-tile spec are further VMEM/compute wins
    # not applied here to keep the kernel portable across v5e/v6e/v7x.
    return k_pad[:m, :m], sigma_square


# ------------------------------- reference --------------------------------

def _reference(x, *, sigma=None, track_running_stats=True, alpha=1.0):
    x = x.astype(jnp.float32)
    l2 = jnp.sum((x[None, :, :] - x[:, None, :]) ** 2, axis=2)
    if track_running_stats:
        sigma_square = alpha * jnp.mean(l2)
    else:
        sigma_square = jnp.float32(sigma) ** 2
    return jnp.exp(-l2 / (2.0 * sigma_square)), sigma_square


if __name__ == "__main__":
    key = jax.random.PRNGKey(0)

    # Small shape consistent with the module's (minibatch, F) input contract.
    M, F = 8, 32
    x = jax.random.normal(key, (M, F), dtype=jnp.float32)

    k_mat, sigma_sq = gaussian_kernel(x, track_running_stats=True, alpha=1.0)
    k_mat = jax.block_until_ready(k_mat)
    sigma_sq = jax.block_until_ready(sigma_sq)
    k_ref, sig_ref = _reference(x, track_running_stats=True, alpha=1.0)
    assert k_mat.shape == (M, M)
    assert jnp.allclose(k_mat, k_ref, atol=1e-4, rtol=1e-4)
    assert jnp.allclose(sigma_sq, sig_ref, atol=1e-3, rtol=1e-4)

    # Fixed-sigma path (track_running_stats=False).
    k_fix, _ = gaussian_kernel(x, sigma=2.0, track_running_stats=False)
    k_fix = jax.block_until_ready(k_fix)
    k_fix_ref, _ = _reference(x, sigma=2.0, track_running_stats=False)
    assert jnp.allclose(k_fix, k_fix_ref, atol=1e-4, rtol=1e-4)

    # Exercise the F-chunked (3-axis, accumulator-scratch) path used for large F / v7x.
    M2, F2 = 16, 256
    x2 = jax.random.normal(jax.random.PRNGKey(1), (M2, F2), dtype=jnp.float32)
    k2, sig2 = gaussian_kernel(x2, force_f_chunk=True, tk_target=128)
    k2 = jax.block_until_ready(k2)
    k2_ref, sig2_ref = _reference(x2)
    assert k2.shape == (M2, M2)
    assert jnp.allclose(k2, k2_ref, atol=1e-4, rtol=1e-4)
    assert jnp.allclose(sig2, sig2_ref, atol=1e-3, rtol=1e-4)

    print("KERNEL_OK")
</pallas_src>

<mosaic_0001>
module attributes {stable_mosaic.version = 11 : i64} {
  func.func @_gaussian_kernel_2d(%arg0: i32, %arg1: i32, %arg2: memref<1xf32, #tpu.memory_space<smem>>, %arg3: memref<8x32xf32, #tpu.memory_space<vmem>>, %arg4: memref<32x128xf32, #tpu.memory_space<vmem>>, %arg5: memref<8x1xf32, #tpu.memory_space<vmem>>, %arg6: memref<1x128xf32, #tpu.memory_space<vmem>>, %arg7: memref<8x128xf32, #tpu.memory_space<vmem>>) attributes {dimension_semantics = [#tpu.dimension_semantics<parallel>, #tpu.dimension_semantics<parallel>], iteration_bounds = array<i64: 1, 1>, scalar_prefetch = 0 : i64, scratch_operands = 0 : i64, tpu.core_type = #tpu.core_type<tc>, window_params = [{transform_indices = @transform_0, window_bounds = array<i64: 1>}, {transform_indices = @transform_1, window_bounds = array<i64: 8, 32>}, {transform_indices = @transform_2, window_bounds = array<i64: 32, 128>}, {transform_indices = @transform_3, window_bounds = array<i64: 8, 1>}, {transform_indices = @transform_4, window_bounds = array<i64: 1, 128>}, {transform_indices = @transform_5, window_bounds = array<i64: 8, 128>}]} {
    %c0 = arith.constant 0 : index
    %c0_0 = arith.constant 0 : index
    %0 = vector.load %arg3[%c0, %c0_0] : memref<8x32xf32, #tpu.memory_space<vmem>>, vector<8x32xf32>
    %c0_1 = arith.constant 0 : index
    %c0_2 = arith.constant 0 : index
    %1 = vector.load %arg4[%c0_1, %c0_2] : memref<32x128xf32, #tpu.memory_space<vmem>>, vector<32x128xf32>
    %cst = arith.constant dense<0.000000e+00> : vector<8x128xf32>
    %2 = tpu.matmul %0, %1, %cst {dimension_numbers = #tpu.dot_dimension_numbers<[1], [0], [0], [1], [0, 0, 1, 1], [], []>} : vector<8x32xf32>, vector<32x128xf32>, vector<8x128xf32> -> vector<8x128xf32>
    %c0_3 = arith.constant 0 : index
    %c0_4 = arith.constant 0 : index
    %3 = vector.load %arg5[%c0_3, %c0_4] : memref<8x1xf32, #tpu.memory_space<vmem>>, vector<8x1xf32>
    %c0_5 = arith.constant 0 : index
    %c0_6 = arith.constant 0 : index
    %4 = vector.load %arg6[%c0_5, %c0_6] : memref<1x128xf32, #tpu.memory_space<vmem>>, vector<1x128xf32>
    %5 = vector.broadcast %3 : vector<8x1xf32> to vector<8x128xf32>
    %6 = vector.broadcast %4 : vector<1x128xf32> to vector<8x128xf32>
    %7 = arith.addf %5, %6 : vector<8x128xf32>
    %cst_7 = arith.constant 2.000000e+00 : f32
    %8 = vector.broadcast %cst_7 : f32 to vector<8x128xf32>
    %9 = arith.mulf %8, %2 : vector<8x128xf32>
    %10 = arith.subf %7, %9 : vector<8x128xf32>
    %cst_8 = arith.constant 0.000000e+00 : f32
    %11 = vector.broadcast %cst_8 : f32 to vector<8x128xf32>
    %12 = arith.maximumf %10, %11 : vector<8x128xf32>
    %c0_9 = arith.constant 0 : index
    %13 = memref.load %arg2[%c0_9] : memref<1xf32, #tpu.memory_space<smem>>
    %14 = vector.broadcast %13 : f32 to vector<8x128xf32>
    %15 = arith.mulf %12, %14 : vector<8x128xf32>
    %16 = math.exp %15 : vector<8x128xf32>
    %c0_10 = arith.constant 0 : index
    %c0_11 = arith.constant 0 : index
    %17 = vector.load %arg7[%c0_10, %c0_11] : memref<8x128xf32, #tpu.memory_space<vmem>>, vector<8x128xf32>
    tpu.vector_store %arg7[%c0_10, %c0_11], %16 {strides = array<i32>} : memref<8x128xf32, #tpu.memory_space<vmem>>, vector<8x128xf32>,
    return
  }
  func.func @transform_0(%arg0: i32, %arg1: i32) -> i32 {
    %c0_i32 = arith.constant 0 : i32
    %c0_i32_0 = arith.constant 0 : i32
    return %c0_i32 : i32
  }
  func.func @transform_1(%arg0: i32, %arg1: i32) -> (i32, i32) {
    %c0_i32 = arith.constant 0 : i32
    %c0_i32_0 = arith.constant 0 : i32
    return %arg0, %c0_i32 : i32, i32
  }
  func.func @transform_2(%arg0: i32, %arg1: i32) -> (i32, i32) {
    %c0_i32 = arith.constant 0 : i32
    %c0_i32_0 = arith.constant 0 : i32
    return %c0_i32, %arg1 : i32, i32
  }
  func.func @transform_3(%arg0: i32, %arg1: i32) -> (i32, i32) {
    %c0_i32 = arith.constant 0 : i32
    %c0_i32_0 = arith.constant 0 : i32
    return %arg0, %c0_i32 : i32, i32
  }
  func.func @transform_4(%arg0: i32, %arg1: i32) -> (i32, i32) {
    %c0_i32 = arith.constant 0 : i32
    %c0_i32_0 = arith.constant 0 : i32
    return %c0_i32, %arg1 : i32, i32
  }
  func.func @transform_5(%arg0: i32, %arg1: i32) -> (i32, i32) {
    %c0_i32 = arith.constant 0 : i32
    return %arg0, %arg1 : i32, i32
  }
}

</mosaic_0001>

<llo_original>
// kernel: tpu_custom_call.1
$region0: #{tpu_custom_call.1}
  #allocation0 [shape = 'u32[]', space=smem, size = 0x4, offset = 0x4, fixed_abs, tag = 'smem constant byte address 0x4 - core index']
  #allocation1 [shape = 'u32[72,128]{1,0:T(1,128)}', space=vmem, size = 0x9000, scoped, tag = 'internal scratch']
  #allocation2 [shape = 'f32[1]{0:T(128)S(6)}', space=smem, size = 0x200, scoped, tag = 'scoped memory for tpu_custom_call.1']
  %s0 = inlined_call_operand.<no memory space> [shape: f32[1], index: 0, kind: input, shape index: {}]
  %s1 = inlined_call_operand.vmem [shape: f32[8,32], index: 1, kind: input, shape index: {}]
  %s2 = inlined_call_operand.hbm [shape: f32[32,128], index: 2, kind: input, shape index: {}]
  %s3 = inlined_call_operand.vmem [shape: f32[8,1], index: 3, kind: input, shape index: {}]
  %s4 = inlined_call_operand.vmem [shape: f32[1,128], index: 4, kind: input, shape index: {}]
  %s5 = inlined_call_operand.hbm [shape: f32[8,128], index: 5, kind: output, shape index: {}]
  %s6 = sld [smem:[#allocation0]]
  $region34: #{tpu_custom_call.1} parent=0
    _
  %s8 = ssub.s32 1, %s6
  %s9 = scalar_select 0, %s8, %s6
  %10 = sst [smem:[#allocation2]] %s0
  $region1: #{tpu_custom_call.1} parent=0
    #allocation3 [shape = 'u8[16384]{0}', space=vmem, size = 0x4000, scoped, tag = 'input window, operand 2, single buffered']
    #allocation4 [shape = 's32[1]{0}', space=sflag, size = 0x4, scoped, tag = 'scoped memory for tpu_custom_call.1']
    #allocation5 [shape = 's32[1]{0}', space=sflag, size = 0x4, scoped, tag = 'scoped memory for tpu_custom_call.1']
    #allocation6 [shape = 'u8[4096]{0}', space=vmem, size = 0x1000, scoped, tag = 'output window, operand 0, single buffered']
    %11 = vsyncpa [#allocation4], 0
    %12 = vsyncpa [#allocation5], 0
    // Predicated region
    $region2: #{tpu_custom_call.1} parent=1 // pred_check
      _
    $region3: #{tpu_custom_call.1} parent=1 // pred_check_branch
      %14 = sbr.rel (0) target = $region5
    $region4: #{tpu_custom_call.1} parent=1 // pred_region
      _
    $region5: #{tpu_custom_call.1} parent=1 // pred_fallthru
      _
    // Predicated region
    $region6: #{tpu_custom_call.1} parent=1 // pred_check
      _
    $region7: #{tpu_custom_call.1} parent=1 // pred_check_branch
      %16 = sbr.rel (0) target = $region9
    $region8: #{tpu_custom_call.1} parent=1 // pred_region
      _
    $region9: #{tpu_custom_call.1} parent=1 // pred_fallthru
      _
    // Predicated region
    $region10: #{tpu_custom_call.1} parent=1 // pred_check
      _
    $region11: #{tpu_custom_call.1} parent=1 // pred_check_branch
      %18 = sbr.rel (0) target = $region13
    $region12: #{tpu_custom_call.1} parent=1 // pred_region
      %20 = vsyncadd [#allocation4], 0
      %s21 = sshll.u32 %s2, 4
      %s22 = int_to_ptr.hbm [resolvable:$true] %s21
      %s23 = sshll.u32 [#allocation3], 4
      %s24 = int_to_ptr.vmem [resolvable:$true] %s23
      %29 = dma.hbm_to_vmem [thread:$0]  %s22, 512, %s24, [#allocation4], 128, 128, 8
    $region13: #{tpu_custom_call.1} parent=1 // pred_fallthru
      _
    // Predicated region
    $region14: #{tpu_custom_call.1} parent=1 // pred_check
      _
    $region15: #{tpu_custom_call.1} parent=1 // pred_check_branch
      %31 = sbr.rel (0) target = $region17
    $region16: #{tpu_custom_call.1} parent=1 // pred_region
      _
    $region17: #{tpu_custom_call.1} parent=1 // pred_fallthru
      _
    // Predicated region
    $region18: #{tpu_custom_call.1} parent=1 // pred_check
      _
    $region19: #{tpu_custom_call.1} parent=1 // pred_check_branch
      %33 = sbr.rel (0) target = $region21
    $region20: #{tpu_custom_call.1} parent=1 // pred_region
      _
    $region21: #{tpu_custom_call.1} parent=1 // pred_fallthru
      _
    // Predicated region
    $region22: #{tpu_custom_call.1} parent=1 // pred_check
      _
    $region23: #{tpu_custom_call.1} parent=1 // pred_check_branch
      %35 = sbr.rel (0) target = $region25
    $region24: #{tpu_custom_call.1} parent=1 // pred_region
      %37 = dma.done [#allocation4], 512
    $region25: #{tpu_custom_call.1} parent=1 // pred_fallthru
      _
    %v38 = vld [vmem:[%s1] sm:$0xff]
    %v39 = vld [vmem:[#allocation3] sm:$0xff]
    %v40 = vld [vmem:[#allocation3 + $0x8] sm:$0xff]
    %v41 = vld [vmem:[#allocation3 + $0x10] sm:$0xff]
    %v42 = vld [vmem:[#allocation3 + $0x18] sm:$0xff]
    %vm43 = vcmask 261120
    %v45 = vsel %vm43, %v38, 0
    %47 = vmatpush.msra.mxu0 0.0
    %48 = vmatpush.msra.mxu0 0.0
    %49 = vmatpush.msra.mxu0 0.0
    %50 = vmatpush.msra.mxu0 0.0
    %51 = vmatpush.msra.mxu0 0.0
    %52 = vmatpush.msra.mxu0 0.0
    %53 = vmatpush.msra.mxu0 0.0
    %54 = vmatpush.msra.mxu0 0.0
    %55 = vmatpush.msra.mxu0 0.0
    %56 = vmatpush.msra.mxu0 0.0
    %57 = vmatpush.msra.mxu0 0.0
    %58 = vmatpush.msra.mxu0 0.0
    %59 = vmatpush.msra.mxu0 %v42
    %60 = vmatpush.msra.mxu0 %v41
    %61 = vmatpush.msra.mxu0 %v40
    %62 = vmatpush.msra.mxu0 %v39
    %63 = vmatmul.f32.gmra.mxu0 %v45
    %v64 = vpop.f32.mrf.mxu0
    %v65 = vadd.f32 0.0, %v64
    %66 = vdwg.mxu0
    %v67 = vld [vmem:[%s3] sm:$0xff]
    %v68 = vld [vmem:[%s4] sm:$0x1]
    %70 = vset.pattern.permute.xlu0 0
    %71 = vperm.xlu0 %70, %v67
    %v72 = vpop.permute.xlu0 %71
    %v75 = vperm.slane %v68, 0
    %v77 = vadd.f32 %v72, %v75
    %v78 = vmul.f32 %v65, 2.0
    %v79 = vsub.f32 %v77, %v78
    %v80 = vmax.f32 %v79, 0.0
    %s81 = sld [smem:[#allocation2]]
    %v82 = vstv %s81
    %v83 = vmul.f32 %v80, %v82
    %v84 = vmul.f32 %v83, 1.442695
    %v85 = vpow.pop %v84
    %86 = vst [vmem:[#allocation6] sm:$0xff] %v85
    // Predicated region
    $region26: #{tpu_custom_call.1} parent=1 // pred_check
      _
    $region27: #{tpu_custom_call.1} parent=1 // pred_check_branch
      %88 = sbr.rel (0) target = $region29
    $region28: #{tpu_custom_call.1} parent=1 // pred_region
      %90 = vsyncadd [#allocation5], 0
      %s92 = sshll.u32 [#allocation6], 4
      %s93 = int_to_ptr.vmem [resolvable:$true] %s92
      %s94 = sshll.u32 %s5, 4
      %s95 = int_to_ptr.hbm [resolvable:$true] %s94
      %97 = dma.vmem_to_hbm [thread:$0]  %s93, 128, %s95, [#allocation5]
    $region29: #{tpu_custom_call.1} parent=1 // pred_fallthru
      _
    // Predicated region
    $region30: #{tpu_custom_call.1} parent=1 // pred_check
      _
    $region31: #{tpu_custom_call.1} parent=1 // pred_check_branch
      %99 = sbr.rel (0) target = $region33
    $region32: #{tpu_custom_call.1} parent=1 // pred_region
      %101 = dma.done [#allocation5], 128
    $region33: #{tpu_custom_call.1} parent=1 // pred_fallthru
      _
    %102 = vsyncpa [#allocation4], 1
    %103 = vsyncpa [#allocation5], 1

</llo_original>
